<compile_context>
chip_gen: v7x
topology: tpu7x:2x2x1
jax: 0.10.0
libtpu: 0.0.40
codegen_flags: <defaults>
</compile_context>

<pallas_src>
import jax
import jax.numpy as jnp
from jax.experimental import pallas as pl
from jax.experimental.pallas import tpu as pltpu

NUM_JOINTS = 21
NUM_BONES = 20
NUM_NASA_BONES = 16
HIDDEN = 32
SCALE_CM = 100.0
NQ = 128  # query points per batch element

JOINTS_FOR_NASA = jnp.array(
    [0, 2, 3, 17, 5, 6, 18, 8, 9, 20, 11, 12, 19, 14, 15, 16], dtype=jnp.int32)

# simplified biomech skeleton parent table (wrist root + 5 chains of 4 joints)
# TODO(synk): exact biomech joint ordering / convert_joints from HALO not reproduced.
PARENTS = [0, 0, 1, 2, 3, 0, 5, 6, 7, 0, 9, 10, 11, 0, 13, 14, 15, 0, 17, 18, 19]

# change_axes(..., target='halo') stand-in (y/z swap with a sign flip)
# TODO(synk): exact change_axes matrix from the HALO repo not reproduced.
CHANGE_AXES_MAT = jnp.array(
    [[1., 0., 0., 0.],
     [0., 0., 1., 0.],
     [0., -1., 0., 0.],
     [0., 0., 0., 1.]], dtype=jnp.float32)


# ----------------------------------------------------------------------------
# Fused Pallas kernel: (folded) point transform + occupancy MLP
# ----------------------------------------------------------------------------
def _fused_occupancy_kernel(pts_ref, a_ref, bias_ref, w2_ref, b2_ref, out_ref):
    """Fused per-bone transform + occupancy MLP, flattened lane-dense layout.

    pts_ref : (B*4, N)   raw homogeneous points, N on the lane axis
    a_ref   : (B*H, 4)   layer-1 weights with per-bone transforms and the
                         point-space transform pre-folded
    bias_ref: (B*H, 1)   bone-length conditioning + layer-1 bias
    w2_ref  : (H, 1)     layer-2 weights (shared, VMEM)
    b2_ref  : (1,)       layer-2 bias (shared scalar, SMEM)
    out_ref : (B, N)     lane-dense occupancy output (single unmasked store)
    """
    bt = out_ref.shape[0]                       # static per-block batch size
    w2 = w2_ref[...]                            # (H, 1)
    b2 = b2_ref[0]                              # SMEM scalar read
    rows = []
    for b in range(bt):                         # static unroll (B is small)
        p = pts_ref[4 * b:4 * (b + 1), :]               # (4, N)
        a = a_ref[HIDDEN * b:HIDDEN * (b + 1), :]       # (H, 4)
        bias = bias_ref[HIDDEN * b:HIDDEN * (b + 1), :]  # (H, 1)
        # K=4 contraction as 4 VPU broadcast-FMAs (MXU at K=4 is ~3% utilized).
        h = (a[:, 0:1] * p[0:1, :]
             + a[:, 1:2] * p[1:2, :]
             + a[:, 2:3] * p[2:3, :]
             + a[:, 3:4] * p[3:4, :]
             + bias)                                     # (H, N)
        h = jnp.maximum(h, 0.0)
        rows.append(jnp.sum(w2 * h, axis=0, keepdims=True))  # (1, N) XLU reduce
    logits = rows[0] if bt == 1 else jnp.concatenate(rows, axis=0)  # (B, N)
    out_ref[...] = jax.nn.sigmoid(logits + b2)           # full-lane store


def _pick_n_tile(N):
    """Single block for small work (launch/step-latency bound); tile the query
    axis with 512-2048 lane tiles only when NQ grows to mesh-grid sizes."""
    if N <= 2048:
        return N
    for nt in (2048, 1024, 512, 256, 128):
        if N % nt == 0:
            return nt
    return N


def fused_occupancy(pts_flat, a_flat, bias_flat, w2, b2):
    """pts_flat: (B*4, N), a_flat: (B*H, 4), bias_flat: (B*H, 1) -> occ (B, N)."""
    BT4, N = pts_flat.shape
    B = BT4 // 4
    nt = _pick_n_tile(N)
    gn = N // nt
    return pl.pallas_call(
        _fused_occupancy_kernel,
        out_shape=jax.ShapeDtypeStruct((B, N), jnp.float32),
        grid=(gn,),
        in_specs=[
            pl.BlockSpec((B * 4, nt), lambda n: (0, n)),
            pl.BlockSpec((B * HIDDEN, 4), lambda n: (0, 0)),
            pl.BlockSpec((B * HIDDEN, 1), lambda n: (0, 0)),
            pl.BlockSpec((HIDDEN, 1), lambda n: (0, 0)),
            pl.BlockSpec(memory_space=pltpu.MemorySpace.SMEM),  # b2 scalar
        ],
        out_specs=pl.BlockSpec((B, nt), lambda n: (0, n)),
        compiler_params=pltpu.CompilerParams(
            dimension_semantics=("parallel",)),
    )(pts_flat.astype(jnp.float32), a_flat.astype(jnp.float32),
      bias_flat.astype(jnp.float32), w2.astype(jnp.float32),
      b2.astype(jnp.float32))


# ----------------------------------------------------------------------------
# Wrapper-side glue (tiny per-batch 3x3/4x4 math) — plain JAX
# ----------------------------------------------------------------------------
def _normalize(v, eps=1e-8):
    return v / (jnp.linalg.norm(v, axis=-1, keepdims=True) + eps)


def points_to_hom_flat(pts):
    """(B, N, 3) -> (B*4, N) homogeneous, lane-dense, batch flattened on sublanes."""
    B, N, _ = pts.shape
    ptt = jnp.transpose(pts, (0, 2, 1)).astype(jnp.float32)          # (B,3,N)
    hom = jnp.concatenate([ptt, jnp.ones((B, 1, N), jnp.float32)], axis=1)
    return hom.reshape(B * 4, N)


def apply_rigid(mat, pts):
    """(B,4,4) rigid transform applied to (B,N,3) points -> (B,N,3)."""
    return (jnp.einsum('bij,bnj->bni', mat[:, :3, :3], pts)
            + mat[:, None, :3, 3])


def rigid_inverse(mat):
    """Analytic inverse of a rigid [R|t] 4x4 (replaces jnp.linalg.inv)."""
    R = mat[:, :3, :3]
    t = mat[:, :3, 3]
    Rt = jnp.swapaxes(R, 1, 2)
    ti = -jnp.einsum('bij,bj->bi', Rt, t)
    top = jnp.concatenate([Rt, ti[..., None]], axis=-1)
    bottom = jnp.broadcast_to(jnp.array([[[0., 0., 0., 1.]]], jnp.float32),
                              (mat.shape[0], 1, 4))
    return jnp.concatenate([top, bottom], axis=1)


def canonical_normalization_matrix(kps, is_right):
    """Simplified global normalizer matrix: wrist to origin, palm frame aligned.
    R rows are the frame axes, t = -R @ root.
    TODO(synk): exact HALO transform_to_canonical kinematics not reproduced."""
    root = kps[:, 0]
    v1 = kps[:, 4] - root
    v2 = kps[:, 7] - root
    x = _normalize(v1)
    z = _normalize(jnp.cross(x, v2))
    z = z * jnp.where(is_right > 0.5, 1.0, -1.0)[:, None]
    y = jnp.cross(z, x)
    R = jnp.stack([x, y, z], axis=1)                   # (B,3,3) rows = axes
    t = -jnp.einsum('bij,bj->bi', R, root)
    top = jnp.concatenate([R, t[:, :, None]], axis=-1)
    bottom = jnp.broadcast_to(jnp.array([[[0., 0., 0., 1.]]], jnp.float32),
                              (kps.shape[0], 1, 4))
    return jnp.concatenate([top, bottom], axis=1)      # (B,4,4)


def pose_normalizer(normalized_kps):
    """Simplified PoseConverter: per-joint un-pose matrices.

    Same convention as canonical_normalization_matrix: R rows are the local
    frame axes, so p_local = R @ (p - p_joint) and t = -R @ p_joint.
    TODO(synk): exact HALO PoseConverter kinematics not reproduced."""
    B = normalized_kps.shape[0]
    parents = jnp.array(PARENTS, dtype=jnp.int32)
    pj = normalized_kps                                # (B,21,3)
    pp = normalized_kps[:, parents]
    d = pj - pp
    d = d.at[:, 0].set(jnp.array([1., 0., 0.], jnp.float32))
    x = _normalize(d)
    up = jnp.broadcast_to(jnp.array([0., 0., 1.], jnp.float32), x.shape)
    up = jnp.where(jnp.abs(x[..., 2:3]) > 0.95,
                   jnp.array([0., 1., 0.], jnp.float32), up)
    z = _normalize(jnp.cross(x, up))
    y = jnp.cross(z, x)
    R = jnp.stack([x, y, z], axis=-2)                  # (B,21,3,3) rows = axes
    t = -jnp.einsum('bjik,bjk->bji', R, pj)            # -R @ p_joint
    top = jnp.concatenate([R, t[..., None]], axis=-1)  # (B,21,3,4)
    bottom = jnp.broadcast_to(jnp.array([0., 0., 0., 1.], jnp.float32),
                              (B, NUM_JOINTS, 1, 4))
    return jnp.concatenate([top, bottom], axis=2)      # (B,21,4,4)


def get_bone_lengths(normalized_kps):
    """child - parent bone lengths from the 21 normalized keypoints."""
    parents = jnp.array(PARENTS, dtype=jnp.int32)
    diffs = normalized_kps[:, 1:] - normalized_kps[:, parents[1:]]   # (B,20,3)
    return jnp.sqrt(jnp.sum(diffs * diffs, axis=-1) + 1e-12)         # (B,20)


def scale_halo_trans_mat(trans_mat, scale=0.4):
    # S @ T @ S^-1 with S = scale*I : rotation unchanged, translation * scale.
    # TODO(synk): exact HALO scale_halo_trans_mat not reproduced.
    return trans_mat.at[..., :3, 3].multiply(scale)


def get_halo_inputs(kps_cm, is_right_vec):
    kps = kps_cm / SCALE_CM
    canon_mat = canonical_normalization_matrix(kps, is_right_vec)
    # Fold change_axes into the normalization matrix (single composed transform).
    normalization_mat = jnp.einsum('ij,bjk->bik', CHANGE_AXES_MAT, canon_mat)
    normalized_kps = apply_rigid(normalization_mat, kps)
    bone_lengths = get_bone_lengths(normalized_kps)                   # (B,20)
    unpose_mat = pose_normalizer(normalized_kps)[:, JOINTS_FOR_NASA]  # (B,16,4,4)
    unpose_mat_scaled = scale_halo_trans_mat(unpose_mat)
    halo_inputs = {'inputs': unpose_mat_scaled, 'bone_lengths': bone_lengths}
    return halo_inputs, normalization_mat, normalized_kps * SCALE_CM


# ----------------------------------------------------------------------------
# Layer-1 folding: per-bone transforms + point-space transform -> (B*H, 4)
# ----------------------------------------------------------------------------
def fold_layer1_weights(unpose_mat_scaled, point_mat, w1a):
    """A[b] = (t_flat[b] @ w1a)^T @ P[b], so layer 1 is just A @ p_raw.
    TODO(synk): the real NASA/HALO net uses per-bone sub-MLPs with a max/blend
    over bones; this single-hidden-layer folding is a structural simplification."""
    B = unpose_mat_scaled.shape[0]
    # feat[:, 4j+i] = (T_j @ p)_i  ==>  t_flat[b, k, 4j+i] = T[b, j, i, k]
    t_flat = jnp.transpose(unpose_mat_scaled, (0, 3, 1, 2)).reshape(
        B, 4, 4 * NUM_NASA_BONES).astype(jnp.float32)
    w1_eff = jnp.einsum('bkf,fh->bkh', t_flat, w1a.astype(jnp.float32))  # (B,4,H)
    a_fold = jnp.einsum('bkh,bkl->bhl', w1_eff, point_mat.astype(jnp.float32))
    return a_fold.reshape(B * HIDDEN, 4)


def fold_layer1_bias(bone_lengths, w1b, b1):
    cond = bone_lengths.astype(jnp.float32) @ w1b.astype(jnp.float32) + b1
    return cond.reshape(-1, 1)                           # (B*H, 1)


# ----------------------------------------------------------------------------
# Module-level API (HaloAdapter.forward / .query_points)
# ----------------------------------------------------------------------------
def make_query_grid():
    xs = jnp.linspace(-0.5, 0.5, 4)
    ys = jnp.linspace(-0.5, 0.5, 4)
    zs = jnp.linspace(-0.5, 0.5, 8)
    gx, gy, gz = jnp.meshgrid(xs, ys, zs, indexing='ij')
    return jnp.stack([gx, gy, gz], axis=-1).reshape(-1, 3)   # (128, 3)


def init_halo_params(key):
    k1, k2, k3 = jax.random.split(key, 3)
    in_dim = 4 * NUM_NASA_BONES
    w1a = jax.random.normal(k1, (in_dim, HIDDEN), jnp.float32) * 0.1
    w1b = jax.random.normal(k2, (NUM_BONES, HIDDEN), jnp.float32) * 0.1
    b1 = jnp.zeros((1, HIDDEN), jnp.float32)
    w2 = jax.random.normal(k3, (HIDDEN, 1), jnp.float32) * 0.1
    b2 = jnp.zeros((1,), jnp.float32)
    return (w1a, w1b, b1, w2, b2)


def halo_adapter_forward(joints_cm, params, return_kps=True):
    """HaloAdapter.forward: normalize joints, build HALO inputs, evaluate the
    occupancy field on a query grid (the compute inside generate_mesh), and
    optionally un-normalize the keypoints.
    TODO(synk): MISE / marching-cubes mesh extraction has no Pallas equivalent."""
    B = joints_cm.shape[0]
    is_right_vec = jnp.ones((B,), jnp.float32)
    halo_inputs, normalization_mat, normalized_kps = get_halo_inputs(
        joints_cm, is_right_vec)
    w1a, w1b, b1, w2, b2 = params

    q = make_query_grid()                                   # (NQ,3) normalized space
    pts_flat = points_to_hom_flat(jnp.broadcast_to(q[None], (B, NQ, 3)))
    # grid path point-space transform: scale xyz by 2.5 (folded into layer 1)
    point_mat = jnp.broadcast_to(
        jnp.diag(jnp.array([2.5, 2.5, 2.5, 1.0], jnp.float32))[None], (B, 4, 4))
    a_fold = fold_layer1_weights(halo_inputs['inputs'], point_mat, w1a)
    bias_fold = fold_layer1_bias(halo_inputs['bone_lengths'], w1b, b1)
    occ = fused_occupancy(pts_flat, a_fold, bias_fold, w2, b2)          # Pallas
    if not return_kps:
        return occ
    inv_norm = rigid_inverse(normalization_mat)             # analytic, not linalg.inv
    undo_norm_kps = apply_rigid(inv_norm, normalized_kps)
    return occ, undo_norm_kps


def halo_adapter_query_points(query_points_cm, joints_cm, params):
    """HaloAdapter.query_points."""
    B = joints_cm.shape[0]
    is_right_vec = jnp.ones((B,), jnp.float32)
    halo_inputs, normalization_mat, _ = get_halo_inputs(joints_cm, is_right_vec)
    w1a, w1b, b1, w2, b2 = params
    # fold (cm -> m), normalization, and *2.5 into one per-batch 4x4
    s25 = jnp.diag(jnp.array([2.5, 2.5, 2.5, 1.0], jnp.float32))
    sinv100 = jnp.diag(jnp.array([1.0 / SCALE_CM, 1.0 / SCALE_CM,
                                  1.0 / SCALE_CM, 1.0], jnp.float32))
    point_mat = jnp.einsum('ij,bjk,kl->bil', s25, normalization_mat, sinv100)
    a_fold = fold_layer1_weights(halo_inputs['inputs'], point_mat, w1a)
    bias_fold = fold_layer1_bias(halo_inputs['bone_lengths'], w1b, b1)
    pts_flat = points_to_hom_flat(query_points_cm)           # raw cm points
    return fused_occupancy(pts_flat, a_fold, bias_fold, w2, b2)         # Pallas


if __name__ == "__main__":
    key = jax.random.PRNGKey(0)
    k_joints, k_params, k_q = jax.random.split(key, 3)
    B = 2
    # synthetic hand keypoints in cm (biomech order assumed)
    joints = jax.random.normal(k_joints, (B, NUM_JOINTS, 3), jnp.float32) * 3.0
    joints = joints + jnp.array([5.0, -2.0, 10.0], jnp.float32)
    params = init_halo_params(k_params)

    # jit the whole API so the tiny folding einsums fuse around the single
    # pallas_call (the kernel body is sub-microsecond at these sizes).
    forward_fn = jax.jit(halo_adapter_forward, static_argnames=("return_kps",))
    query_fn = jax.jit(halo_adapter_query_points)

    occ, undo_kps = forward_fn(joints, params, return_kps=True)

    query_points = jax.random.normal(k_q, (B, NQ, 3), jnp.float32) * 5.0  # cm
    occ_q = query_fn(query_points, joints, params)

    jax.block_until_ready((occ, undo_kps, occ_q))
    assert occ.shape == (B, NQ)
    assert undo_kps.shape == (B, NUM_JOINTS, 3)
    assert occ_q.shape == (B, NQ)
    assert bool(jnp.all(jnp.isfinite(occ))) and bool(jnp.all(jnp.isfinite(occ_q)))
    print("KERNEL_OK")
</pallas_src>

<mosaic_0001>
module attributes {stable_mosaic.version = 11 : i64} {
  func.func @_fused_occupancy_kernel(%arg0: i32, %arg1: memref<8x128xf32, #tpu.memory_space<vmem>>, %arg2: memref<64x4xf32, #tpu.memory_space<vmem>>, %arg3: memref<64x1xf32, #tpu.memory_space<vmem>>, %arg4: memref<32x1xf32, #tpu.memory_space<vmem>>, %arg5: memref<1xf32, #tpu.memory_space<smem>>, %arg6: memref<2x128xf32, #tpu.memory_space<vmem>>) attributes {dimension_semantics = [#tpu.dimension_semantics<parallel>], iteration_bounds = array<i64: 1>, scalar_prefetch = 0 : i64, scratch_operands = 0 : i64, tpu.core_type = #tpu.core_type<tc>, window_params = [{transform_indices = @transform_0, window_bounds = array<i64: 8, 128>}, {pipeline_mode = #tpu.pipeline_mode<synchronous>, transform_indices = @transform_1, window_bounds = array<i64: 64, 4>}, {pipeline_mode = #tpu.pipeline_mode<synchronous>, transform_indices = @transform_2, window_bounds = array<i64: 64, 1>}, {pipeline_mode = #tpu.pipeline_mode<synchronous>, transform_indices = @transform_3, window_bounds = array<i64: 32, 1>}, {transform_indices = @transform_4, window_bounds = array<i64: 1>}, {transform_indices = @transform_5, window_bounds = array<i64: 2, 128>}]} {
    %c0 = arith.constant 0 : index
    %c0_0 = arith.constant 0 : index
    %0 = vector.load %arg4[%c0, %c0_0] : memref<32x1xf32, #tpu.memory_space<vmem>>, vector<32x1xf32>
    %c0_1 = arith.constant 0 : index
    %1 = memref.load %arg5[%c0_1] : memref<1xf32, #tpu.memory_space<smem>>
    %c0_2 = arith.constant 0 : index
    %c0_3 = arith.constant 0 : index
    %2 = vector.load %arg1[%c0_2, %c0_3] : memref<8x128xf32, #tpu.memory_space<vmem>>, vector<4x128xf32>
    %c0_4 = arith.constant 0 : index
    %c0_5 = arith.constant 0 : index
    %3 = vector.load %arg2[%c0_4, %c0_5] : memref<64x4xf32, #tpu.memory_space<vmem>>, vector<32x4xf32>
    %c0_6 = arith.constant 0 : index
    %c0_7 = arith.constant 0 : index
    %4 = vector.load %arg3[%c0_6, %c0_7] : memref<64x1xf32, #tpu.memory_space<vmem>>, vector<32x1xf32>
    %5 = vector.extract_strided_slice %3 {offsets = [0, 0], sizes = [32, 1], strides = [1, 1]} : vector<32x4xf32> to vector<32x1xf32>
    %6 = vector.extract_strided_slice %2 {offsets = [0, 0], sizes = [1, 128], strides = [1, 1]} : vector<4x128xf32> to vector<1x128xf32>
    %7 = vector.broadcast %5 : vector<32x1xf32> to vector<32x128xf32>
    %8 = vector.broadcast %6 : vector<1x128xf32> to vector<32x128xf32>
    %9 = arith.mulf %7, %8 : vector<32x128xf32>
    %10 = vector.extract_strided_slice %3 {offsets = [0, 1], sizes = [32, 1], strides = [1, 1]} : vector<32x4xf32> to vector<32x1xf32>
    %11 = vector.extract_strided_slice %2 {offsets = [1, 0], sizes = [1, 128], strides = [1, 1]} : vector<4x128xf32> to vector<1x128xf32>
    %12 = vector.broadcast %10 : vector<32x1xf32> to vector<32x128xf32>
    %13 = vector.broadcast %11 : vector<1x128xf32> to vector<32x128xf32>
    %14 = arith.mulf %12, %13 : vector<32x128xf32>
    %15 = arith.addf %9, %14 : vector<32x128xf32>
    %16 = vector.extract_strided_slice %3 {offsets = [0, 2], sizes = [32, 1], strides = [1, 1]} : vector<32x4xf32> to vector<32x1xf32>
    %17 = vector.extract_strided_slice %2 {offsets = [2, 0], sizes = [1, 128], strides = [1, 1]} : vector<4x128xf32> to vector<1x128xf32>
    %18 = vector.broadcast %16 : vector<32x1xf32> to vector<32x128xf32>
    %19 = vector.broadcast %17 : vector<1x128xf32> to vector<32x128xf32>
    %20 = arith.mulf %18, %19 : vector<32x128xf32>
    %21 = arith.addf %15, %20 : vector<32x128xf32>
    %22 = vector.extract_strided_slice %3 {offsets = [0, 3], sizes = [32, 1], strides = [1, 1]} : vector<32x4xf32> to vector<32x1xf32>
    %23 = vector.extract_strided_slice %2 {offsets = [3, 0], sizes = [1, 128], strides = [1, 1]} : vector<4x128xf32> to vector<1x128xf32>
    %24 = vector.broadcast %22 : vector<32x1xf32> to vector<32x128xf32>
    %25 = vector.broadcast %23 : vector<1x128xf32> to vector<32x128xf32>
    %26 = arith.mulf %24, %25 : vector<32x128xf32>
    %27 = arith.addf %21, %26 : vector<32x128xf32>
    %28 = vector.broadcast %4 : vector<32x1xf32> to vector<32x128xf32>
    %29 = arith.addf %27, %28 : vector<32x128xf32>
    %cst = arith.constant 0.000000e+00 : f32
    %30 = vector.broadcast %cst : f32 to vector<32x128xf32>
    %31 = arith.maximumf %29, %30 : vector<32x128xf32>
    %32 = vector.broadcast %0 : vector<32x1xf32> to vector<32x128xf32>
    %33 = arith.mulf %32, %31 : vector<32x128xf32>
    %cst_8 = arith.constant dense<0.000000e+00> : vector<128xf32>
    %34 = vector.multi_reduction <add>, %33, %cst_8 [0] : vector<32x128xf32> to vector<128xf32>
    %35 = vector.shape_cast %34 : vector<128xf32> to vector<1x128xf32>
    %c4 = arith.constant 4 : index
    %c0_9 = arith.constant 0 : index
    %36 = vector.load %arg1[%c4, %c0_9] : memref<8x128xf32, #tpu.memory_space<vmem>>, vector<4x128xf32>
    %c32 = arith.constant 32 : index
    %c0_10 = arith.constant 0 : index
    %37 = vector.load %arg2[%c32, %c0_10] : memref<64x4xf32, #tpu.memory_space<vmem>>, vector<32x4xf32>
    %c32_11 = arith.constant 32 : index
    %c0_12 = arith.constant 0 : index
    %38 = vector.load %arg3[%c32_11, %c0_12] : memref<64x1xf32, #tpu.memory_space<vmem>>, vector<32x1xf32>
    %39 = vector.extract_strided_slice %37 {offsets = [0, 0], sizes = [32, 1], strides = [1, 1]} : vector<32x4xf32> to vector<32x1xf32>
    %40 = vector.extract_strided_slice %36 {offsets = [0, 0], sizes = [1, 128], strides = [1, 1]} : vector<4x128xf32> to vector<1x128xf32>
    %41 = vector.broadcast %39 : vector<32x1xf32> to vector<32x128xf32>
    %42 = vector.broadcast %40 : vector<1x128xf32> to vector<32x128xf32>
    %43 = arith.mulf %41, %42 : vector<32x128xf32>
    %44 = vector.extract_strided_slice %37 {offsets = [0, 1], sizes = [32, 1], strides = [1, 1]} : vector<32x4xf32> to vector<32x1xf32>
    %45 = vector.extract_strided_slice %36 {offsets = [1, 0], sizes = [1, 128], strides = [1, 1]} : vector<4x128xf32> to vector<1x128xf32>
    %46 = vector.broadcast %44 : vector<32x1xf32> to vector<32x128xf32>
    %47 = vector.broadcast %45 : vector<1x128xf32> to vector<32x128xf32>
    %48 = arith.mulf %46, %47 : vector<32x128xf32>
    %49 = arith.addf %43, %48 : vector<32x128xf32>
    %50 = vector.extract_strided_slice %37 {offsets = [0, 2], sizes = [32, 1], strides = [1, 1]} : vector<32x4xf32> to vector<32x1xf32>
    %51 = vector.extract_strided_slice %36 {offsets = [2, 0], sizes = [1, 128], strides = [1, 1]} : vector<4x128xf32> to vector<1x128xf32>
    %52 = vector.broadcast %50 : vector<32x1xf32> to vector<32x128xf32>
    %53 = vector.broadcast %51 : vector<1x128xf32> to vector<32x128xf32>
    %54 = arith.mulf %52, %53 : vector<32x128xf32>
    %55 = arith.addf %49, %54 : vector<32x128xf32>
    %56 = vector.extract_strided_slice %37 {offsets = [0, 3], sizes = [32, 1], strides = [1, 1]} : vector<32x4xf32> to vector<32x1xf32>
    %57 = vector.extract_strided_slice %36 {offsets = [3, 0], sizes = [1, 128], strides = [1, 1]} : vector<4x128xf32> to vector<1x128xf32>
    %58 = vector.broadcast %56 : vector<32x1xf32> to vector<32x128xf32>
    %59 = vector.broadcast %57 : vector<1x128xf32> to vector<32x128xf32>
    %60 = arith.mulf %58, %59 : vector<32x128xf32>
    %61 = arith.addf %55, %60 : vector<32x128xf32>
    %62 = vector.broadcast %38 : vector<32x1xf32> to vector<32x128xf32>
    %63 = arith.addf %61, %62 : vector<32x128xf32>
    %cst_13 = arith.constant 0.000000e+00 : f32
    %64 = vector.broadcast %cst_13 : f32 to vector<32x128xf32>
    %65 = arith.maximumf %63, %64 : vector<32x128xf32>
    %66 = vector.broadcast %0 : vector<32x1xf32> to vector<32x128xf32>
    %67 = arith.mulf %66, %65 : vector<32x128xf32>
    %cst_14 = arith.constant dense<0.000000e+00> : vector<128xf32>
    %68 = vector.multi_reduction <add>, %67, %cst_14 [0] : vector<32x128xf32> to vector<128xf32>
    %69 = vector.shape_cast %68 : vector<128xf32> to vector<1x128xf32>
    %70 = tpu.concatenate %35, %69 in 0 : vector<1x128xf32>, vector<1x128xf32> -> vector<2x128xf32>
    %71 = vector.broadcast %1 : f32 to vector<2x128xf32>
    %72 = arith.addf %70, %71 : vector<2x128xf32>
    %73 = arith.negf %72 : vector<2x128xf32>
    %74 = math.exp %73 : vector<2x128xf32>
    %cst_15 = arith.constant 1.000000e+00 : f32
    %75 = vector.broadcast %cst_15 : f32 to vector<2x128xf32>
    %76 = arith.addf %75, %74 : vector<2x128xf32>
    %77 = arith.divf %75, %76 : vector<2x128xf32>
    %c0_16 = arith.constant 0 : index
    %c0_17 = arith.constant 0 : index
    %78 = vector.load %arg6[%c0_16, %c0_17] : memref<2x128xf32, #tpu.memory_space<vmem>>, vector<2x128xf32>
    tpu.vector_store %arg6[%c0_16, %c0_17], %77 {strides = array<i32>} : memref<2x128xf32, #tpu.memory_space<vmem>>, vector<2x128xf32>,
    return
  }
  func.func @transform_0(%arg0: i32) -> (i32, i32) {
    %c0_i32 = arith.constant 0 : i32
    %c0_i32_0 = arith.constant 0 : i32
    return %c0_i32, %arg0 : i32, i32
  }
  func.func @transform_1(%arg0: i32) -> (i32, i32) {
    %c0_i32 = arith.constant 0 : i32
    %c0_i32_0 = arith.constant 0 : i32
    %c0_i32_1 = arith.constant 0 : i32
    return %c0_i32, %c0_i32_0 : i32, i32
  }
  func.func @transform_2(%arg0: i32) -> (i32, i32) {
    %c0_i32 = arith.constant 0 : i32
    %c0_i32_0 = arith.constant 0 : i32
    %c0_i32_1 = arith.constant 0 : i32
    return %c0_i32, %c0_i32_0 : i32, i32
  }
  func.func @transform_3(%arg0: i32) -> (i32, i32) {
    %c0_i32 = arith.constant 0 : i32
    %c0_i32_0 = arith.constant 0 : i32
    %c0_i32_1 = arith.constant 0 : i32
    return %c0_i32, %c0_i32_0 : i32, i32
  }
  func.func @transform_4(%arg0: i32) -> i32 {
    %c0_i32 = arith.constant 0 : i32
    %c0_i32_0 = arith.constant 0 : i32
    return %c0_i32 : i32
  }
  func.func @transform_5(%arg0: i32) -> (i32, i32) {
    %c0_i32 = arith.constant 0 : i32
    %c0_i32_0 = arith.constant 0 : i32
    return %c0_i32, %arg0 : i32, i32
  }
}

</mosaic_0001>

<llo_original>
// kernel: neg.21
$region0: #{neg.21}
  #allocation0 [shape = 's32[1]{0}', space=sflag, size = 0x4, scoped, tag = 'scoped memory for neg.21']
  %s0 = inlined_call_operand.vmem [shape: f32[2,3], index: 0, kind: input, shape index: {}]
  %s1 = inlined_call_operand.vmem [shape: f32[2,3], index: 1, kind: output, shape index: {}]
  %v2 = vld [vmem:[%s0] sm:$0x3]
  %3 = xla_tuple %v2
  %4 = xla_tuple %3
  %v5 = vxor.u32 %v2, 2147483648
  %6 = xla_tuple %v5
  %7 = vst [vmem:[%s1] sm:$0x3] %v5

// kernel: halo_adapter_forward.1
$region0: #{halo_adapter_forward.1}
  #allocation0 [shape = 'u32[]', space=smem, size = 0x4, offset = 0x4, fixed_abs, tag = 'smem constant byte address 0x4 - core index']
  #allocation1 [shape = 'u32[144,128]{1,0:T(1,128)}', space=vmem, size = 0x12000, scoped, tag = 'internal scratch']
  #allocation2 [shape = 'f32[1]{0:T(128)S(6)}', space=smem, size = 0x200, scoped, tag = 'scoped memory for halo_adapter_forward.1']
  %s0 = inlined_call_operand.vmem [shape: f32[8,128], index: 0, kind: input, shape index: {}]
  %s1 = inlined_call_operand.vmem [shape: f32[64,4], index: 1, kind: input, shape index: {}]
  %s2 = inlined_call_operand.vmem [shape: f32[64,1], index: 2, kind: input, shape index: {}]
  %s3 = inlined_call_operand.vmem [shape: f32[32,1], index: 3, kind: input, shape index: {}]
  %s4 = inlined_call_operand.<no memory space> [shape: f32[1], index: 4, kind: input, shape index: {}]
  %s5 = inlined_call_operand.hbm [shape: f32[2,128], index: 5, kind: output, shape index: {}]
  %s6 = sld [smem:[#allocation0]]
  $region30: #{halo_adapter_forward.1} parent=0
    _
  %s8 = ssub.s32 1, %s6
  %s9 = scalar_select 0, %s8, %s6
  %10 = sst [smem:[#allocation2]] %s4
  $region1: #{halo_adapter_forward.1} parent=0
    #allocation3 [shape = 'u8[1024]{0}', space=vmem, size = 0x400, scoped, tag = 'output window, operand 0, single buffered']
    #allocation4 [shape = 's32[1]{0}', space=sflag, size = 0x4, scoped, tag = 'scoped memory for halo_adapter_forward.1']
    %11 = vsyncpa [#allocation4], 0
    // Predicated region
    $region2: #{halo_adapter_forward.1} parent=1 // pred_check
      _
    $region3: #{halo_adapter_forward.1} parent=1 // pred_check_branch
      %13 = sbr.rel (0) target = $region5
    $region4: #{halo_adapter_forward.1} parent=1 // pred_region
      _
    $region5: #{halo_adapter_forward.1} parent=1 // pred_fallthru
      _
    // Predicated region
    $region6: #{halo_adapter_forward.1} parent=1 // pred_check
      _
    $region7: #{halo_adapter_forward.1} parent=1 // pred_check_branch
      %15 = sbr.rel (0) target = $region9
    $region8: #{halo_adapter_forward.1} parent=1 // pred_region
      _
    $region9: #{halo_adapter_forward.1} parent=1 // pred_fallthru
      _
    // Predicated region
    $region10: #{halo_adapter_forward.1} parent=1 // pred_check
      _
    $region11: #{halo_adapter_forward.1} parent=1 // pred_check_branch
      %17 = sbr.rel (0) target = $region13
    $region12: #{halo_adapter_forward.1} parent=1 // pred_region
      _
    $region13: #{halo_adapter_forward.1} parent=1 // pred_fallthru
      _
    // Predicated region
    $region14: #{halo_adapter_forward.1} parent=1 // pred_check
      _
    $region15: #{halo_adapter_forward.1} parent=1 // pred_check_branch
      %19 = sbr.rel (0) target = $region17
    $region16: #{halo_adapter_forward.1} parent=1 // pred_region
      _
    $region17: #{halo_adapter_forward.1} parent=1 // pred_fallthru
      _
    // Predicated region
    $region18: #{halo_adapter_forward.1} parent=1 // pred_check
      _
    $region19: #{halo_adapter_forward.1} parent=1 // pred_check_branch
      %21 = sbr.rel (0) target = $region21
    $region20: #{halo_adapter_forward.1} parent=1 // pred_region
      _
    $region21: #{halo_adapter_forward.1} parent=1 // pred_fallthru
      _
    %v22 = vld [vmem:[%s3] sm:$0xff]
    %v23 = vld [vmem:[%s3 + $0x8] sm:$0xff]
    %v24 = vld [vmem:[%s3 + $0x10] sm:$0xff]
    %v25 = vld [vmem:[%s3 + $0x18] sm:$0xff]
    %s26 = sld [smem:[#allocation2]]
    %v27 = vld [vmem:[%s0] sm:$0xf]
    %v28 = vld [vmem:[%s1] sm:$0xff]
    %v29 = vld [vmem:[%s1 + $0x8] sm:$0xff]
    %v30 = vld [vmem:[%s1 + $0x10] sm:$0xff]
    %v31 = vld [vmem:[%s1 + $0x18] sm:$0xff]
    %v32 = vld [vmem:[%s2] sm:$0xff]
    %v33 = vld [vmem:[%s2 + $0x8] sm:$0xff]
    %v34 = vld [vmem:[%s2 + $0x10] sm:$0xff]
    %v35 = vld [vmem:[%s2 + $0x18] sm:$0xff]
    %37 = vset.pattern.permute.xlu0 0
    %38 = vperm.xlu0 %37, %v28
    %v39 = vpop.permute.xlu0 %38
    %42 = vset.pattern.permute.xlu0 0
    %43 = vperm.xlu0 %42, %v29
    %v44 = vpop.permute.xlu0 %43
    %47 = vset.pattern.permute.xlu0 0
    %48 = vperm.xlu0 %47, %v30
    %v49 = vpop.permute.xlu0 %48
    %52 = vset.pattern.permute.xlu0 0
    %53 = vperm.xlu0 %52, %v31
    %v54 = vpop.permute.xlu0 %53
    %v56 = vlaneseq
    %v57 = vshrl.u32 %v56, 7
    %v58 = vsub.s32 0, %v57
    %v59 = vrot.slane %v27, %v58
    %v60 = vmul.f32 %v39, %v59
    %v61 = vmul.f32 %v44, %v59
    %v62 = vmul.f32 %v49, %v59
    %v63 = vmul.f32 %v54, %v59
    %64 = vset.pattern.permute.xlu0 1
    %65 = vperm.xlu0 %64, %v28
    %v66 = vpop.permute.xlu0 %65
    %68 = vset.pattern.permute.xlu0 1
    %69 = vperm.xlu0 %68, %v29
    %v70 = vpop.permute.xlu0 %69
    %72 = vset.pattern.permute.xlu0 1
    %73 = vperm.xlu0 %72, %v30
    %v74 = vpop.permute.xlu0 %73
    %76 = vset.pattern.permute.xlu0 1
    %77 = vperm.xlu0 %76, %v31
    %v78 = vpop.permute.xlu0 %77
    %v80 = vlaneseq
    %v81 = vshrl.u32 %v80, 7
    %v82 = vsub.s32 1, %v81
    %v83 = vrot.slane %v27, %v82
    %v84 = vmul.f32 %v66, %v83
    %v85 = vmul.f32 %v70, %v83
    %v86 = vmul.f32 %v74, %v83
    %v87 = vmul.f32 %v78, %v83
    %v88 = vadd.f32 %v60, %v84
    %v89 = vadd.f32 %v61, %v85
    %v90 = vadd.f32 %v62, %v86
    %v91 = vadd.f32 %v63, %v87
    %92 = vset.pattern.permute.xlu0 2
    %93 = vperm.xlu0 %92, %v28
    %v94 = vpop.permute.xlu0 %93
    %96 = vset.pattern.permute.xlu0 2
    %97 = vperm.xlu0 %96, %v29
    %v98 = vpop.permute.xlu0 %97
    %100 = vset.pattern.permute.xlu0 2
    %101 = vperm.xlu0 %100, %v30
    %v102 = vpop.permute.xlu0 %101
    %104 = vset.pattern.permute.xlu0 2
    %105 = vperm.xlu0 %104, %v31
    %v106 = vpop.permute.xlu0 %105
    %v108 = vlaneseq
    %v109 = vshrl.u32 %v108, 7
    %v110 = vsub.s32 2, %v109
    %v111 = vrot.slane %v27, %v110
    %v112 = vmul.f32 %v94, %v111
    %v113 = vmul.f32 %v98, %v111
    %v114 = vmul.f32 %v102, %v111
    %v115 = vmul.f32 %v106, %v111
    %v116 = vadd.f32 %v88, %v112
    %v117 = vadd.f32 %v89, %v113
    %v118 = vadd.f32 %v90, %v114
    %v119 = vadd.f32 %v91, %v115
    %120 = vset.pattern.permute.xlu0 3
    %121 = vperm.xlu0 %120, %v28
    %v122 = vpop.permute.xlu0 %121
    %124 = vset.pattern.permute.xlu0 3
    %125 = vperm.xlu0 %124, %v29
    %v126 = vpop.permute.xlu0 %125
    %128 = vset.pattern.permute.xlu0 3
    %129 = vperm.xlu0 %128, %v30
    %v130 = vpop.permute.xlu0 %129
    %132 = vset.pattern.permute.xlu0 3
    %133 = vperm.xlu0 %132, %v31
    %v134 = vpop.permute.xlu0 %133
    %v136 = vlaneseq
    %v137 = vshrl.u32 %v136, 7
    %v138 = vsub.s32 3, %v137
    %v139 = vrot.slane %v27, %v138
    %v140 = vmul.f32 %v122, %v139
    %v141 = vmul.f32 %v126, %v139
    %v142 = vmul.f32 %v130, %v139
    %v143 = vmul.f32 %v134, %v139
    %v144 = vadd.f32 %v116, %v140
    %v145 = vadd.f32 %v117, %v141
    %v146 = vadd.f32 %v118, %v142
    %v147 = vadd.f32 %v119, %v143
    %149 = vset.pattern.permute.xlu0 0
    %150 = vperm.xlu0 %149, %v32
    %v151 = vpop.permute.xlu0 %150
    %154 = vset.pattern.permute.xlu0 0
    %155 = vperm.xlu0 %154, %v33
    %v156 = vpop.permute.xlu0 %155
    %159 = vset.pattern.permute.xlu0 0
    %160 = vperm.xlu0 %159, %v34
    %v161 = vpop.permute.xlu0 %160
    %164 = vset.pattern.permute.xlu0 0
    %165 = vperm.xlu0 %164, %v35
    %v166 = vpop.permute.xlu0 %165
    %v168 = vadd.f32 %v144, %v151
    %v169 = vadd.f32 %v145, %v156
    %v170 = vadd.f32 %v146, %v161
    %v171 = vadd.f32 %v147, %v166
    %v172 = vmax.f32 %v168, 0.0
    %v173 = vmax.f32 %v169, 0.0
    %v174 = vmax.f32 %v170, 0.0
    %v175 = vmax.f32 %v171, 0.0
    %177 = vset.pattern.permute.xlu0 0
    %178 = vperm.xlu0 %177, %v22
    %v179 = vpop.permute.xlu0 %178
    %182 = vset.pattern.permute.xlu0 0
    %183 = vperm.xlu0 %182, %v23
    %v184 = vpop.permute.xlu0 %183
    %187 = vset.pattern.permute.xlu0 0
    %188 = vperm.xlu0 %187, %v24
    %v189 = vpop.permute.xlu0 %188
    %192 = vset.pattern.permute.xlu0 0
    %193 = vperm.xlu0 %192, %v25
    %v194 = vpop.permute.xlu0 %193
    %v196 = vmul.f32 %v179, %v172
    %v197 = vmul.f32 %v184, %v173
    %v198 = vmul.f32 %v189, %v174
    %v199 = vmul.f32 %v194, %v175
    %v200 = vadd.f32 %v196, %v197
    %v201 = vadd.f32 %v200, %v198
    %v202 = vadd.f32 %v201, %v199
    %v203 = vrot.slane %v202, 4
    %v204 = vadd.f32 %v202, %v203
    %v205 = vrot.slane %v204, 2
    %v206 = vadd.f32 %v204, %v205
    %v207 = vrot.slane %v206, 1
    %v208 = vadd.f32 %v206, %v207
    %v209 = vld [vmem:[%s0 + $0x4] sm:$0xf]
    %v210 = vld [vmem:[%s1 + $0x20] sm:$0xff]
    %v211 = vld [vmem:[%s1 + $0x28] sm:$0xff]
    %v212 = vld [vmem:[%s1 + $0x30] sm:$0xff]
    %v213 = vld [vmem:[%s1 + $0x38] sm:$0xff]
    %v214 = vld [vmem:[%s2 + $0x20] sm:$0xff]
    %v215 = vld [vmem:[%s2 + $0x28] sm:$0xff]
    %v216 = vld [vmem:[%s2 + $0x30] sm:$0xff]
    %v217 = vld [vmem:[%s2 + $0x38] sm:$0xff]
    %219 = vset.pattern.permute.xlu0 0
    %220 = vperm.xlu0 %219, %v210
    %v221 = vpop.permute.xlu0 %220
    %224 = vset.pattern.permute.xlu0 0
    %225 = vperm.xlu0 %224, %v211
    %v226 = vpop.permute.xlu0 %225
    %229 = vset.pattern.permute.xlu0 0
    %230 = vperm.xlu0 %229, %v212
    %v231 = vpop.permute.xlu0 %230
    %234 = vset.pattern.permute.xlu0 0
    %235 = vperm.xlu0 %234, %v213
    %v236 = vpop.permute.xlu0 %235
    %v238 = vlaneseq
    %v239 = vshrl.u32 %v238, 7
    %v240 = vsub.s32 0, %v239
    %v241 = vrot.slane %v209, %v240
    %v242 = vmul.f32 %v221, %v241
    %v243 = vmul.f32 %v226, %v241
    %v244 = vmul.f32 %v231, %v241
    %v245 = vmul.f32 %v236, %v241
    %246 = vset.pattern.permute.xlu0 1
    %247 = vperm.xlu0 %246, %v210
    %v248 = vpop.permute.xlu0 %247
    %250 = vset.pattern.permute.xlu0 1
    %251 = vperm.xlu0 %250, %v211
    %v252 = vpop.permute.xlu0 %251
    %254 = vset.pattern.permute.xlu0 1
    %255 = vperm.xlu0 %254, %v212
    %v256 = vpop.permute.xlu0 %255
    %258 = vset.pattern.permute.xlu0 1
    %259 = vperm.xlu0 %258, %v213
    %v260 = vpop.permute.xlu0 %259
    %v262 = vlaneseq
    %v263 = vshrl.u32 %v262, 7
    %v264 = vsub.s32 1, %v263
    %v265 = vrot.slane %v209, %v264
    %v266 = vmul.f32 %v248, %v265
    %v267 = vmul.f32 %v252, %v265
    %v268 = vmul.f32 %v256, %v265
    %v269 = vmul.f32 %v260, %v265
    %v270 = vadd.f32 %v242, %v266
    %v271 = vadd.f32 %v243, %v267
    %v272 = vadd.f32 %v244, %v268
    %v273 = vadd.f32 %v245, %v269
    %274 = vset.pattern.permute.xlu0 2
    %275 = vperm.xlu0 %274, %v210
    %v276 = vpop.permute.xlu0 %275
    %278 = vset.pattern.permute.xlu0 2
    %279 = vperm.xlu0 %278, %v211
    %v280 = vpop.permute.xlu0 %279
    %282 = vset.pattern.permute.xlu0 2
    %283 = vperm.xlu0 %282, %v212
    %v284 = vpop.permute.xlu0 %283
    %286 = vset.pattern.permute.xlu0 2
    %287 = vperm.xlu0 %286, %v213
    %v288 = vpop.permute.xlu0 %287
    %v290 = vlaneseq
    %v291 = vshrl.u32 %v290, 7
    %v292 = vsub.s32 2, %v291
    %v293 = vrot.slane %v209, %v292
    %v294 = vmul.f32 %v276, %v293
    %v295 = vmul.f32 %v280, %v293
    %v296 = vmul.f32 %v284, %v293
    %v297 = vmul.f32 %v288, %v293
    %v298 = vadd.f32 %v270, %v294
    %v299 = vadd.f32 %v271, %v295
    %v300 = vadd.f32 %v272, %v296
    %v301 = vadd.f32 %v273, %v297
    %302 = vset.pattern.permute.xlu0 3
    %303 = vperm.xlu0 %302, %v210
    %v304 = vpop.permute.xlu0 %303
    %306 = vset.pattern.permute.xlu0 3
    %307 = vperm.xlu0 %306, %v211
    %v308 = vpop.permute.xlu0 %307
    %310 = vset.pattern.permute.xlu0 3
    %311 = vperm.xlu0 %310, %v212
    %v312 = vpop.permute.xlu0 %311
    %314 = vset.pattern.permute.xlu0 3
    %315 = vperm.xlu0 %314, %v213
    %v316 = vpop.permute.xlu0 %315
    %v318 = vlaneseq
    %v319 = vshrl.u32 %v318, 7
    %v320 = vsub.s32 3, %v319
    %v321 = vrot.slane %v209, %v320
    %v322 = vmul.f32 %v304, %v321
    %v323 = vmul.f32 %v308, %v321
    %v324 = vmul.f32 %v312, %v321
    %v325 = vmul.f32 %v316, %v321
    %v326 = vadd.f32 %v298, %v322
    %v327 = vadd.f32 %v299, %v323
    %v328 = vadd.f32 %v300, %v324
    %v329 = vadd.f32 %v301, %v325
    %331 = vset.pattern.permute.xlu0 0
    %332 = vperm.xlu0 %331, %v214
    %v333 = vpop.permute.xlu0 %332
    %336 = vset.pattern.permute.xlu0 0
    %337 = vperm.xlu0 %336, %v215
    %v338 = vpop.permute.xlu0 %337
    %341 = vset.pattern.permute.xlu0 0
    %342 = vperm.xlu0 %341, %v216
    %v343 = vpop.permute.xlu0 %342
    %346 = vset.pattern.permute.xlu0 0
    %347 = vperm.xlu0 %346, %v217
    %v348 = vpop.permute.xlu0 %347
    %v350 = vadd.f32 %v326, %v333
    %v351 = vadd.f32 %v327, %v338
    %v352 = vadd.f32 %v328, %v343
    %v353 = vadd.f32 %v329, %v348
    %v354 = vmax.f32 %v350, 0.0
    %v355 = vmax.f32 %v351, 0.0
    %v356 = vmax.f32 %v352, 0.0
    %v357 = vmax.f32 %v353, 0.0
    %v358 = vmul.f32 %v179, %v354
    %v359 = vmul.f32 %v184, %v355
    %v360 = vmul.f32 %v189, %v356
    %v361 = vmul.f32 %v194, %v357
    %v362 = vadd.f32 %v358, %v359
    %v363 = vadd.f32 %v362, %v360
    %v364 = vadd.f32 %v363, %v361
    %v365 = vrot.slane %v364, 4
    %v366 = vadd.f32 %v364, %v365
    %v367 = vrot.slane %v366, 2
    %v368 = vadd.f32 %v366, %v367
    %v369 = vrot.slane %v368, 1
    %v370 = vadd.f32 %v368, %v369
    %vm371 = vcmask 1040384
    %v372 = vsel %vm371, %v208, %v370
    %v373 = vstv %s26
    %v374 = vadd.f32 %v372, %v373
    %v375 = vxor.u32 %v374, 2147483648
    %v376 = vmul.f32 %v375, 1.442695
    %v377 = vpow.pop %v376
    %v378 = vadd.f32 %v377, 1.0
    %v379 = vrcp.pop %v378
    %v380 = vmul.f32 1.0, %v379
    %381 = vst [vmem:[#allocation3] sm:$0x3] %v380
    // Predicated region
    $region22: #{halo_adapter_forward.1} parent=1 // pred_check
      _
    $region23: #{halo_adapter_forward.1} parent=1 // pred_check_branch
      %383 = sbr.rel (0) target = $region25
    $region24: #{halo_adapter_forward.1} parent=1 // pred_region
      %s385 = ssub.s32 32, 32
      %386 = vsyncadd [#allocation4], %s385
      %s388 = sshll.u32 [#allocation3], 4
      %s389 = int_to_ptr.vmem [resolvable:$true] %s388
      %391 = dma.vmem_to_hbm [thread:$0]  %s389, 32, %s5, [#allocation4]
    $region25: #{halo_adapter_forward.1} parent=1 // pred_fallthru
      _
    // Predicated region
    $region26: #{halo_adapter_forward.1} parent=1 // pred_check
      _
    $region27: #{halo_adapter_forward.1} parent=1 // pred_check_branch
      %393 = sbr.rel (0) target = $region29
    $region28: #{halo_adapter_forward.1} parent=1 // pred_region
      %394 = dma.done [#allocation4], 32
    $region29: #{halo_adapter_forward.1} parent=1 // pred_fallthru
      _
    %395 = vsyncpa [#allocation4], 1

</llo_original>
